<compile_context>
chip_gen: v5e
topology: v5e:2x2
jax: 0.10.0
libtpu: 0.0.40
codegen_flags: <defaults>
</compile_context>

<pallas_src>
import functools
import math

import jax
import jax.numpy as jnp
from jax.experimental import pallas as pl
from jax.experimental.pallas import tpu as pltpu

LOGIT_NORM = math.log(1.0 + math.exp(-1.0))   # softplus normalizer (static)
INV_LOGIT_NORM = 1.0 / LOGIT_NORM


def _poly_loss_kernel(diff_ref, target_ref, out_ref, *, alpha):
    # diff_ref: (R, C) f32 = logits[:,1]-logits[:,0] ; target_ref: (R, C) i32 ; out: (R, C) f32
    d = diff_ref[...]
    sign = 2.0 * target_ref[...].astype(jnp.float32) - 1.0
    m = d * sign                                            # margin

    # logit branch: softplus(-m) / log(1 + e^-1)
    logit_part = jax.nn.softplus(-m) * INV_LOGIT_NORM

    # poly-tail branch: |m|^(-alpha).  For small integer alpha use mul + reciprocal
    # (1 EUP op) instead of pow's exp/log pair.
    a = float(alpha)
    if a.is_integer() and 1 <= int(a) <= 8:
        k = int(a)
        base = m if (k % 2 == 0) else jnp.abs(m)
        p = base
        for _ in range(k - 1):
            p = p * base
        inv_part = 1.0 / p
    else:
        inv_part = jnp.power(jnp.abs(m), -a)

    # select instead of indicator-multiply blend (robust to inf*0 at margin == 0)
    out_ref[...] = jnp.where(m <= 1.0, logit_part, inv_part)


def _lane_width(n):
    for c in (4096, 2048, 1024, 512, 256, 128):
        if n % c == 0:
            return c
    raise ValueError("N must be a multiple of 128")


def _row_block(rows):
    # Prefer sublane-dense blocks (>=8 rows) AND >=2 grid steps (v7x has 2 TCs).
    for r in (64, 32, 16, 8):
        if rows % r == 0 and rows // r >= 2:
            return r
    for r in (64, 32, 16, 8):
        if rows % r == 0:
            return r
    return rows


@functools.partial(jax.jit, static_argnames=("alpha",))
def polynomial_loss(logits, target, *, alpha):
    """logits: [N, 2] f32, target: [N] int -> loss: [N] f32."""
    N = logits.shape[0]
    assert logits.shape == (N, 2)
    assert N % 128 == 0, "pad N to a multiple of 128 for lane density"

    # One fused XLA elementwise pass (reads logits once, writes [N] f32); no transpose.
    diff = (logits[:, 1] - logits[:, 0]).astype(jnp.float32)

    # Free reshapes to a lane/sublane-dense 2-D layout.
    C = _lane_width(N)
    rows = N // C
    R = _row_block(rows)
    diff2 = diff.reshape(rows, C)
    tgt2 = target.astype(jnp.int32).reshape(rows, C)

    grid = (rows // R,)
    out = pl.pallas_call(
        functools.partial(_poly_loss_kernel, alpha=float(alpha)),
        out_shape=jax.ShapeDtypeStruct((rows, C), jnp.float32),
        grid_spec=pltpu.PrefetchScalarGridSpec(
            num_scalar_prefetch=0,
            grid=grid,
            in_specs=[
                pl.BlockSpec((R, C), lambda i: (i, 0)),   # diff
                pl.BlockSpec((R, C), lambda i: (i, 0)),   # target
            ],
            out_specs=pl.BlockSpec((R, C), lambda i: (i, 0)),
        ),
        compiler_params=pltpu.CompilerParams(
            dimension_semantics=("parallel",)),
    )(diff2, tgt2)
    return out.reshape(N)


def polynomial_loss_ref(logits, target, *, alpha):
    """Pure-JAX reference mirroring the PyTorch module (multiply-blend form)."""
    target_sign = 2.0 * target.astype(jnp.float32) - 1.0
    margin = (logits[:, 1] - logits[:, 0]) * target_sign
    indicator = (margin <= 1.0).astype(jnp.float32)
    inv_part = jnp.power(jnp.abs(margin), -float(alpha))
    logit_part = jax.nn.softplus(-margin) / LOGIT_NORM
    return logit_part * indicator + inv_part * (1.0 - indicator)


if __name__ == "__main__":
    # PolynomialLoss has no learnable parameters; alpha/type are constructor args.
    alpha = 2.0
    key = jax.random.PRNGKey(0)
    k1, k2 = jax.random.split(key)

    # Small case: exercises the degenerate single-row tiling path.
    N_small = 1024
    logits_s = jax.random.normal(k1, (N_small, 2), dtype=jnp.float32) * 2.0
    target_s = jax.random.bernoulli(k2, 0.5, (N_small,)).astype(jnp.int32)
    loss_s = polynomial_loss(logits_s, target_s, alpha=alpha)
    jax.block_until_ready(loss_s)
    ref_s = polynomial_loss_ref(logits_s, target_s, alpha=alpha)
    assert loss_s.shape == (N_small,)
    assert jnp.allclose(loss_s, ref_s, rtol=1e-5, atol=1e-6), "mismatch (small case)"

    # Tiled case: exercises the (8, 4096) sublane/lane-dense blocks with a 2-step grid.
    N = 65536
    logits = jax.random.normal(k1, (N, 2), dtype=jnp.float32) * 2.0
    target = jax.random.bernoulli(k2, 0.5, (N,)).astype(jnp.int32)
    loss = polynomial_loss(logits, target, alpha=alpha)
    jax.block_until_ready(loss)
    ref = polynomial_loss_ref(logits, target, alpha=alpha)
    assert loss.shape == (N,)
    assert jnp.allclose(loss, ref, rtol=1e-5, atol=1e-6), "mismatch (tiled case)"

    print("KERNEL_OK")
</pallas_src>

<mosaic_0001>
module attributes {stable_mosaic.version = 11 : i64} {
  func.func @_poly_loss_kernel(%arg0: i32, %arg1: memref<1x1024xf32, #tpu.memory_space<vmem>>, %arg2: memref<1x1024xi32, #tpu.memory_space<vmem>>, %arg3: memref<1x1024xf32, #tpu.memory_space<vmem>>) attributes {dimension_semantics = [#tpu.dimension_semantics<parallel>], iteration_bounds = array<i64: 1>, scalar_prefetch = 0 : i64, scratch_operands = 0 : i64, tpu.core_type = #tpu.core_type<tc>, window_params = [{transform_indices = @transform_0, window_bounds = array<i64: 1, 1024>}, {transform_indices = @transform_1, window_bounds = array<i64: 1, 1024>}, {transform_indices = @transform_2, window_bounds = array<i64: 1, 1024>}]} {
    %c0 = arith.constant 0 : index
    %c0_0 = arith.constant 0 : index
    %0 = vector.load %arg1[%c0, %c0_0] : memref<1x1024xf32, #tpu.memory_space<vmem>>, vector<1x1024xf32>
    %c0_1 = arith.constant 0 : index
    %c0_2 = arith.constant 0 : index
    %1 = vector.load %arg2[%c0_1, %c0_2] : memref<1x1024xi32, #tpu.memory_space<vmem>>, vector<1x1024xi32>
    %2 = arith.sitofp %1 : vector<1x1024xi32> to vector<1x1024xf32>
    %cst = arith.constant 2.000000e+00 : f32
    %3 = vector.broadcast %cst : f32 to vector<1x1024xf32>
    %4 = arith.mulf %3, %2 : vector<1x1024xf32>
    %cst_3 = arith.constant 1.000000e+00 : f32
    %5 = vector.broadcast %cst_3 : f32 to vector<1x1024xf32>
    %6 = arith.subf %4, %5 : vector<1x1024xf32>
    %7 = arith.mulf %0, %6 : vector<1x1024xf32>
    %cst_4 = arith.constant 0.000000e+00 : f32
    %8 = vector.broadcast %cst_4 : f32 to vector<1x1024xf32>
    %9 = arith.subf %8, %7 : vector<1x1024xf32>
    %cst_5 = arith.constant 0.000000e+00 : f32
    %10 = vector.broadcast %cst_5 : f32 to vector<1x1024xf32>
    %11 = arith.maximumf %9, %10 : vector<1x1024xf32>
    %12 = vector.broadcast %cst_5 : f32 to vector<1x1024xf32>
    %13 = arith.subf %9, %12 : vector<1x1024xf32>
    %14 = arith.cmpf one, %13, %13 : vector<1x1024xf32>
    %15 = vector.broadcast %cst_5 : f32 to vector<1x1024xf32>
    %16 = arith.addf %9, %15 : vector<1x1024xf32>
    %17 = math.absf %13 : vector<1x1024xf32>
    %cst_6 = arith.constant 0.000000e+00 : f32
    %18 = vector.broadcast %cst_6 : f32 to vector<1x1024xf32>
    %19 = arith.subf %18, %17 : vector<1x1024xf32>
    %20 = math.exp %19 : vector<1x1024xf32>
    %21 = math.log1p %20 : vector<1x1024xf32>
    %22 = arith.addf %11, %21 : vector<1x1024xf32>
    %23 = arith.select %14, %16, %22 : vector<1x1024xi1>, vector<1x1024xf32>
    %cst_7 = arith.constant 3.19221926 : f32
    %24 = vector.broadcast %cst_7 : f32 to vector<1x1024xf32>
    %25 = arith.mulf %23, %24 : vector<1x1024xf32>
    %26 = arith.mulf %7, %7 : vector<1x1024xf32>
    %cst_8 = arith.constant 1.000000e+00 : f32
    %27 = vector.broadcast %cst_8 : f32 to vector<1x1024xf32>
    %28 = arith.divf %27, %26 : vector<1x1024xf32>
    %cst_9 = arith.constant 1.000000e+00 : f32
    %29 = vector.broadcast %cst_9 : f32 to vector<1x1024xf32>
    %30 = arith.cmpf ole, %7, %29 : vector<1x1024xf32>
    %31 = arith.select %30, %25, %28 : vector<1x1024xi1>, vector<1x1024xf32>
    %c0_10 = arith.constant 0 : index
    %c0_11 = arith.constant 0 : index
    %32 = vector.load %arg3[%c0_10, %c0_11] : memref<1x1024xf32, #tpu.memory_space<vmem>>, vector<1x1024xf32>
    tpu.vector_store %arg3[%c0_10, %c0_11], %31 {strides = array<i32>} : memref<1x1024xf32, #tpu.memory_space<vmem>>, vector<1x1024xf32>,
    return
  }
  func.func @transform_0(%arg0: i32) -> (i32, i32) {
    %c0_i32 = arith.constant 0 : i32
    %c0_i32_0 = arith.constant 0 : i32
    return %arg0, %c0_i32 : i32, i32
  }
  func.func @transform_1(%arg0: i32) -> (i32, i32) {
    %c0_i32 = arith.constant 0 : i32
    %c0_i32_0 = arith.constant 0 : i32
    return %arg0, %c0_i32 : i32, i32
  }
  func.func @transform_2(%arg0: i32) -> (i32, i32) {
    %c0_i32 = arith.constant 0 : i32
    %c0_i32_0 = arith.constant 0 : i32
    return %arg0, %c0_i32 : i32, i32
  }
}

</mosaic_0001>

<llo_original>
// kernel: polynomial_loss.1
$region0: #{polynomial_loss.1}
  #allocation0 [shape = 'u32[]', space=smem, size = 0x4, offset = 0x4, fixed_abs, tag = 'smem constant byte address 0x4 - core index']
  #allocation1 [shape = 'u32[72,128]{1,0:T(1,128)}', space=vmem, size = 0x9000, scoped, tag = 'internal scratch']
  %s0 = inlined_call_operand.vmem [shape: f32[1,1024], index: 0, kind: input, shape index: {}]
  %s1 = inlined_call_operand.vmem [shape: s32[1,1024], index: 1, kind: input, shape index: {}]
  %s2 = inlined_call_operand.hbm [shape: f32[1,1024], index: 2, kind: output, shape index: {}]
  %s3 = sld [smem:[#allocation0]]
  $region18: #{polynomial_loss.1} parent=0
    _
  %s5 = ssub.s32 1, %s3
  %s6 = scalar_select 0, %s5, %s3
  $region1: #{polynomial_loss.1} parent=0
    #allocation2 [shape = 'u8[4096]{0}', space=vmem, size = 0x1000, scoped, tag = 'output window, operand 0, single buffered']
    #allocation3 [shape = 's32[1]{0}', space=sflag, size = 0x4, scoped, tag = 'scoped memory for polynomial_loss.1']
    %7 = vsyncpa [#allocation3], 0
    // Predicated region
    $region2: #{polynomial_loss.1} parent=1 // pred_check
      _
    $region3: #{polynomial_loss.1} parent=1 // pred_check_branch
      %9 = sbr.rel (0) target = $region5
    $region4: #{polynomial_loss.1} parent=1 // pred_region
      _
    $region5: #{polynomial_loss.1} parent=1 // pred_fallthru
      _
    // Predicated region
    $region6: #{polynomial_loss.1} parent=1 // pred_check
      _
    $region7: #{polynomial_loss.1} parent=1 // pred_check_branch
      %11 = sbr.rel (0) target = $region9
    $region8: #{polynomial_loss.1} parent=1 // pred_region
      _
    $region9: #{polynomial_loss.1} parent=1 // pred_fallthru
      _
    %v12 = vld [vmem:[%s0] sm:$0xff]
    %v13 = vld [vmem:[%s1] sm:$0xff]
    %v14 = vcvt.s32.f32 %v13
    %v15 = vmul.f32 %v14, 2.0
    %v16 = vsub.f32 %v15, 1.0
    %v17 = vmul.f32 %v12, %v16
    %v18 = vsub.f32 0.0, %v17
    %v19 = vmax.f32 %v18, 0.0
    %vm20 = vcmp.ne.f32.partialorder %v18, %v18
    %v21 = vadd.f32 %v18, 0.0
    %v22 = vand.u32 2147483647, %v18
    %v23 = vsub.f32 0.0, %v22
    %v24 = vmul.f32 %v23, 1.442695
    %v25 = vpow.pop %v24
    %v26 = vadd.f32 %v25, 1.0
    %v27 = vlog2.pop %v26
    %v28 = vmul.f32 %v27, 0.6931472
    %v29 = vmul.f32 -0.5, %v25
    %v30 = vadd.f32 %v29, 1.0
    %v31 = vmul.f32 %v30, %v25
    %v32 = vand.u32 2147483647, %v25
    %vm33 = vcmp.lt.f32.partialorder %v32, 0.0004427343
    %v34 = vsel %vm33, %v31, %v28
    %v35 = vadd.f32 %v19, %v34
    %v36 = vsel %vm20, %v21, %v35
    %v37 = vmul.f32 %v36, 3.1922193
    %v38 = vmul.f32 %v17, %v17
    %v39 = vrcp.pop %v38
    %v40 = vmul.f32 %v38, %v39
    %v41 = vsub.f32 1.0, %v40
    %v42 = vmul.f32 %v39, %v41
    %v43 = vadd.f32 %v39, %v42
    %vm44 = vweird.f32 %v38
    %vm45 = vweird.f32 %v39
    %vm46 = vmor %vm44, %vm45
    %v47 = vsel %vm46, %v39, %v43
    %v48 = vand.u32 2147483647, %v38
    %vm49 = vcmp.eq.f32.partialorder %v48, 8.507059e+37
    %v50 = vand.u32 %v38, 2147483648
    %v51 = vor.u32 1.1754944e-38, %v50
    %v52 = vsel %vm49, %v51, %v47
    %v53 = vmul.f32 1.0, %v52
    %vm54 = vcmp.le.f32.partialorder %v17, 1.0
    %v55 = vsel %vm54, %v37, %v53
    %56 = vst [vmem:[#allocation2] sm:$0xff] %v55
    // Predicated region
    $region10: #{polynomial_loss.1} parent=1 // pred_check
      _
    $region11: #{polynomial_loss.1} parent=1 // pred_check_branch
      %58 = sbr.rel (0) target = $region13
    $region12: #{polynomial_loss.1} parent=1 // pred_region
      %60 = vsyncadd [#allocation3], 0
      %s62 = sshll.u32 [#allocation2], 4
      %s63 = int_to_ptr.vmem [resolvable:$true] %s62
      %s64 = sshll.u32 %s2, 4
      %s65 = int_to_ptr.hbm [resolvable:$true] %s64
      %67 = dma.vmem_to_hbm [thread:$0]  %s63, 128, %s65, [#allocation3]
    $region13: #{polynomial_loss.1} parent=1 // pred_fallthru
      _
    // Predicated region
    $region14: #{polynomial_loss.1} parent=1 // pred_check
      _
    $region15: #{polynomial_loss.1} parent=1 // pred_check_branch
      %69 = sbr.rel (0) target = $region17
    $region16: #{polynomial_loss.1} parent=1 // pred_region
      %71 = dma.done [#allocation3], 128
    $region17: #{polynomial_loss.1} parent=1 // pred_fallthru
      _
    %72 = vsyncpa [#allocation3], 1

</llo_original>
